<compile_context>
chip_gen: v6e
topology: v6e:2x2x1
jax: 0.10.0
libtpu: 0.0.40
codegen_flags: <defaults>
</compile_context>

<pallas_src>
import jax
import jax.numpy as jnp
from jax.experimental import pallas as pl
from jax.experimental.pallas import tpu as pltpu


def oracle_kernel(x_ref, len_ref, wih_ref, blstm_ref, whh_ref, catbox_ref,
                  w1h_ref, w1cb_ref, b1_ref, w2_ref, b2_ref, out_ref):
    # x_ref    : (T*B, E)  f32  time-major word embeddings (batch padded)
    # len_ref  : (B, 1)    i32  sequence lengths (padded rows = 0)
    # wih_ref  : (E, 4H)   bf16 input weights, gate order i,f,g,o along lanes
    # blstm_ref: (1, 4H)   f32  b_ih + b_hh
    # whh_ref  : (H, 4H)   bf16 fused recurrent weights
    # catbox_ref:(B, C+S)  f32  [cat_embed, bbox]
    # w1h_ref  : (H, Mp)   bf16 hidden slice of W1^T (lane-padded)
    # w1cb_ref : (C+S, Mp) bf16 cat/bbox slice of W1^T (lane-padded)
    # b1_ref   : (1, Mp)   f32
    # w2_ref   : (Mp, NCp) bf16 W2^T (padded)
    # b2_ref   : (1, NCp)  f32
    # out_ref  : (B, NCp)  f32  padded logits
    TB, E = x_ref.shape
    B = len_ref.shape[0]
    H = whh_ref.shape[0]
    G = whh_ref.shape[1]          # 4H (= 128 lanes for H = 32)
    T = TB // B

    # ---- Prologue (off the serial chain) ------------------------------------
    # Hoisted LSTM input projection for all timesteps: (T*B, 4H).
    gx = jnp.dot(x_ref[...].astype(wih_ref.dtype), wih_ref[...],
                 preferred_element_type=jnp.float32) + blstm_ref[...]
    # Category/bbox half of the first MLP layer (+ b1): (B, Mp).
    mlp_bias = jnp.dot(catbox_ref[...].astype(w1cb_ref.dtype), w1cb_ref[...],
                       preferred_element_type=jnp.float32) + b1_ref[...]

    # Fused gate activation constants (hoisted):
    #   sigmoid(x) = 0.5 * tanh(0.5 * x) + 0.5   for i/f/o lanes
    #   tanh(x)                                  for g lanes (lanes [2H, 3H))
    lane = jax.lax.broadcasted_iota(jnp.int32, (B, G), 1)
    is_g = (lane >= 2 * H) & (lane < 3 * H)
    scale = jnp.where(is_g, 1.0, 0.5).astype(jnp.float32)    # (B, 4H)
    shift = jnp.where(is_g, 0.0, 0.5).astype(jnp.float32)    # (B, 4H)

    # Hoisted length-mask broadcast (JAX does not CSE broadcast_in_dim).
    len_b = jnp.broadcast_to(len_ref[...], (B, H))            # (B, H) int32

    whh = whh_ref[...]                                        # (H, 4H) bf16
    h = jnp.zeros((B, H), jnp.float32)
    c = jnp.zeros((B, H), jnp.float32)

    # ---- Serial recurrence (fully static unroll, T small) -------------------
    for t in range(T):
        gates = gx[t * B:(t + 1) * B, :] + jnp.dot(
            h.astype(whh.dtype), whh, preferred_element_type=jnp.float32)
        # One full-width tanh covers all four gates' activations.
        act = scale * jnp.tanh(gates * scale) + shift          # (B, 4H) f32
        i_g = act[:, 0:H]
        f_g = act[:, H:2 * H]
        g_g = act[:, 2 * H:3 * H]
        o_g = act[:, 3 * H:4 * H]
        c_new = f_g * c + i_g * g_g
        h_new = o_g * jnp.tanh(c_new)
        valid = t < len_b                                      # (B, H) bool
        h = jnp.where(valid, h_new, h)
        c = jnp.where(valid, c_new, c)

    # ---- MLP epilogue --------------------------------------------------------
    hid = jnp.maximum(
        jnp.dot(h.astype(w1h_ref.dtype), w1h_ref[...],
                preferred_element_type=jnp.float32) + mlp_bias, 0.0)
    out_ref[...] = (jnp.dot(hid.astype(w2_ref.dtype), w2_ref[...],
                            preferred_element_type=jnp.float32) + b2_ref[...])


def prepare_oracle_params(params):
    """One-time weight transforms (transpose / pad / bf16 cast)."""
    f32, bf16 = jnp.float32, jnp.bfloat16
    LANE = 128
    H = params["W_hh"].shape[1]
    C = params["cat_embed"].shape[1]
    S = params["W1"].shape[1] - H - C
    M = params["W1"].shape[0]
    NC = params["W2"].shape[0]
    M_pad = ((M + LANE - 1) // LANE) * LANE
    NC_pad = ((NC + LANE - 1) // LANE) * LANE

    W1 = params["W1"].astype(f32)
    prep = dict(
        wrd_embed=params["wrd_embed"].astype(f32),
        cat_embed=params["cat_embed"].astype(f32),
        wih=params["W_ih"].T.astype(bf16),                           # (E, 4H)
        b_lstm=(params["b_ih"] + params["b_hh"]).reshape(1, 4 * H).astype(f32),
        whh=params["W_hh"].T.astype(bf16),                           # (H, 4H)
        w1h=jnp.zeros((H, M_pad), f32).at[:, :M].set(W1[:, :H].T).astype(bf16),
        w1cb=jnp.zeros((C + S, M_pad), f32).at[:, :M].set(W1[:, H:].T).astype(bf16),
        b1=jnp.zeros((1, M_pad), f32).at[0, :M].set(params["b1"]),
        w2=jnp.zeros((M_pad, NC_pad), f32).at[:M, :NC].set(params["W2"].T).astype(bf16),
        b2=jnp.zeros((1, NC_pad), f32).at[0, :NC].set(params["b2"]),
    )
    prep["_dims"] = (H, C, S, M, NC, M_pad, NC_pad)
    return prep


def oracle_forward(prep, wrds, tgt_cat, tgt_bbox, wrd_len):
    f32 = jnp.float32
    H, C, S, M, NC, M_pad, NC_pad = prep["_dims"]

    # Embedding gathers stay in plain JAX (XLA gather); everything else runs
    # inside the single Pallas kernel.
    x = prep["wrd_embed"][wrds]                              # (B, T, E)
    cat_e = prep["cat_embed"][tgt_cat]                       # (B, C)

    B, T, E = x.shape
    SUB = 8
    B_pad = max(SUB, ((B + SUB - 1) // SUB) * SUB)

    # Time-major, batch-padded word embeddings as one (T*B_pad, E) slab so the
    # kernel's per-timestep gate load is a static, tile-aligned row slice.
    x_tm = jnp.transpose(x, (1, 0, 2))                       # (T, B, E)
    x_tm = jnp.pad(x_tm, ((0, 0), (0, B_pad - B), (0, 0)))
    x_tm = x_tm.reshape(T * B_pad, E).astype(f32)

    catbox = jnp.concatenate([cat_e, tgt_bbox.astype(f32)], axis=-1)  # (B, C+S)
    catbox = jnp.pad(catbox, ((0, B_pad - B), (0, 0)))
    len_p = jnp.pad(wrd_len.astype(jnp.int32).reshape(B, 1),
                    ((0, B_pad - B), (0, 0)))                # pads = 0 -> h stays 0

    vmem = pl.BlockSpec(memory_space=pltpu.MemorySpace.VMEM)
    out = pl.pallas_call(
        oracle_kernel,
        out_shape=jax.ShapeDtypeStruct((B_pad, NC_pad), f32),
        in_specs=[vmem] * 11,
        out_specs=vmem,
    )(x_tm, len_p, prep["wih"], prep["b_lstm"], prep["whh"], catbox,
      prep["w1h"], prep["w1cb"], prep["b1"], prep["w2"], prep["b2"])
    return out[:B, :NC]


def oracle_reference(params, wrds, tgt_cat, tgt_bbox, wrd_len):
    # Pure-JAX f32 reference with identical semantics (for correctness check).
    x = params["wrd_embed"][wrds]
    cat_e = params["cat_embed"][tgt_cat]
    B, T, E = x.shape
    H = params["W_hh"].shape[1]
    h = jnp.zeros((B, H), jnp.float32)
    c = jnp.zeros((B, H), jnp.float32)
    b = params["b_ih"] + params["b_hh"]
    for t in range(T):
        gates = x[:, t] @ params["W_ih"].T + h @ params["W_hh"].T + b
        i = jax.nn.sigmoid(gates[:, :H])
        f = jax.nn.sigmoid(gates[:, H:2 * H])
        g = jnp.tanh(gates[:, 2 * H:3 * H])
        o = jax.nn.sigmoid(gates[:, 3 * H:])
        c_new = f * c + i * g
        h_new = o * jnp.tanh(c_new)
        valid = (t < wrd_len)[:, None]
        h = jnp.where(valid, h_new, h)
        c = jnp.where(valid, c_new, c)
    mlp_in = jnp.concatenate([h, cat_e, tgt_bbox], axis=-1)
    hid = jnp.maximum(mlp_in @ params["W1"].T + params["b1"], 0.0)
    return hid @ params["W2"].T + params["b2"]


def init_params(key, num_wrds, wrd_embed_size, wrd_hidden_size, wrd_pad_id,
                num_cats, cat_embed_size, cat_pad_id, spatial_size,
                mlp_hidden, num_classes):
    ks = jax.random.split(key, 10)
    s = 0.1
    wrd_embed = s * jax.random.normal(ks[0], (num_wrds, wrd_embed_size), jnp.float32)
    wrd_embed = wrd_embed.at[wrd_pad_id].set(0.0)            # padding_idx row zeroed
    cat_embed = s * jax.random.normal(ks[1], (num_cats, cat_embed_size), jnp.float32)
    cat_embed = cat_embed.at[cat_pad_id].set(0.0)            # padding_idx row zeroed
    return dict(
        wrd_embed=wrd_embed,
        cat_embed=cat_embed,
        W_ih=s * jax.random.normal(ks[2], (4 * wrd_hidden_size, wrd_embed_size), jnp.float32),
        W_hh=s * jax.random.normal(ks[3], (4 * wrd_hidden_size, wrd_hidden_size), jnp.float32),
        b_ih=s * jax.random.normal(ks[4], (4 * wrd_hidden_size,), jnp.float32),
        b_hh=s * jax.random.normal(ks[5], (4 * wrd_hidden_size,), jnp.float32),
        W1=s * jax.random.normal(
            ks[6], (mlp_hidden, wrd_hidden_size + cat_embed_size + spatial_size), jnp.float32),
        b1=s * jax.random.normal(ks[7], (mlp_hidden,), jnp.float32),
        W2=s * jax.random.normal(ks[8], (num_classes, mlp_hidden), jnp.float32),
        b2=s * jax.random.normal(ks[9], (num_classes,), jnp.float32),
    )


if __name__ == "__main__":
    # Module hyper-parameters (small, consistent with the forward pass).
    num_wrds, wrd_embed_size, wrd_hidden_size, wrd_pad_id = 100, 32, 32, 0
    num_cats, cat_embed_size, cat_pad_id = 20, 16, 0
    spatial_size, mlp_hidden, num_classes = 8, 64, 10
    B, T = 2, 8

    key = jax.random.PRNGKey(0)
    pkey, dkey = jax.random.split(key)
    params = init_params(pkey, num_wrds, wrd_embed_size, wrd_hidden_size, wrd_pad_id,
                         num_cats, cat_embed_size, cat_pad_id, spatial_size,
                         mlp_hidden, num_classes)
    prep = prepare_oracle_params(params)      # one-time weight transforms

    k1, k2, k3 = jax.random.split(dkey, 3)
    wrd_len = jnp.array([8, 5], dtype=jnp.int32)                       # (B,)
    wrds = jax.random.randint(k1, (B, T), 1, num_wrds)                 # (B, T) token ids
    t_idx = jnp.arange(T)[None, :]
    wrds = jnp.where(t_idx < wrd_len[:, None], wrds, wrd_pad_id)       # pad past length
    tgt_cat = jax.random.randint(k2, (B,), 1, num_cats)                # (B,)
    tgt_bbox = jax.random.uniform(k3, (B, spatial_size), jnp.float32)  # (B, spatial)

    logit = oracle_forward(prep, wrds, tgt_cat, tgt_bbox, wrd_len)
    logit = jax.block_until_ready(logit)

    ref = oracle_reference(params, wrds, tgt_cat, tgt_bbox, wrd_len)
    assert logit.shape == (B, num_classes)
    # bf16 MXU operands in the kernel (f32 accumulation / elementwise) => use a
    # bf16-appropriate tolerance against the pure-f32 reference.
    assert jnp.allclose(logit, ref, atol=2e-2, rtol=2e-2), (logit, ref)
    print("KERNEL_OK")
</pallas_src>

<mosaic_0001>
module attributes {stable_mosaic.version = 11 : i64} {
  func.func @oracle_kernel(%arg0: memref<64x32xf32, #tpu.memory_space<vmem>>, %arg1: memref<8x1xi32, #tpu.memory_space<vmem>>, %arg2: memref<32x128xbf16, #tpu.memory_space<vmem>>, %arg3: memref<1x128xf32, #tpu.memory_space<vmem>>, %arg4: memref<32x128xbf16, #tpu.memory_space<vmem>>, %arg5: memref<8x24xf32, #tpu.memory_space<vmem>>, %arg6: memref<32x128xbf16, #tpu.memory_space<vmem>>, %arg7: memref<24x128xbf16, #tpu.memory_space<vmem>>, %arg8: memref<1x128xf32, #tpu.memory_space<vmem>>, %arg9: memref<128x128xbf16, #tpu.memory_space<vmem>>, %arg10: memref<1x128xf32, #tpu.memory_space<vmem>>, %arg11: memref<8x128xf32, #tpu.memory_space<vmem>>) attributes {dimension_semantics = [], scalar_prefetch = 0 : i64, scratch_operands = 0 : i64, tpu.core_type = #tpu.core_type<tc>} {
    %c0 = arith.constant 0 : index
    %c0_0 = arith.constant 0 : index
    %0 = vector.load %arg0[%c0, %c0_0] : memref<64x32xf32, #tpu.memory_space<vmem>>, vector<64x32xf32>
    %1 = arith.truncf %0 : vector<64x32xf32> to vector<64x32xbf16>
    %c0_1 = arith.constant 0 : index
    %c0_2 = arith.constant 0 : index
    %2 = vector.load %arg2[%c0_1, %c0_2] : memref<32x128xbf16, #tpu.memory_space<vmem>>, vector<32x128xbf16>
    %cst = arith.constant dense<0.000000e+00> : vector<64x128xf32>
    %3 = tpu.matmul %1, %2, %cst {dimension_numbers = #tpu.dot_dimension_numbers<[1], [0], [0], [1], [0, 0, 1, 1], [], []>} : vector<64x32xbf16>, vector<32x128xbf16>, vector<64x128xf32> -> vector<64x128xf32>
    %c0_3 = arith.constant 0 : index
    %c0_4 = arith.constant 0 : index
    %4 = vector.load %arg3[%c0_3, %c0_4] : memref<1x128xf32, #tpu.memory_space<vmem>>, vector<1x128xf32>
    %5 = vector.broadcast %4 : vector<1x128xf32> to vector<64x128xf32>
    %6 = arith.addf %3, %5 : vector<64x128xf32>
    %c0_5 = arith.constant 0 : index
    %c0_6 = arith.constant 0 : index
    %7 = vector.load %arg5[%c0_5, %c0_6] : memref<8x24xf32, #tpu.memory_space<vmem>>, vector<8x24xf32>
    %8 = arith.truncf %7 : vector<8x24xf32> to vector<8x24xbf16>
    %c0_7 = arith.constant 0 : index
    %c0_8 = arith.constant 0 : index
    %9 = vector.load %arg7[%c0_7, %c0_8] : memref<24x128xbf16, #tpu.memory_space<vmem>>, vector<24x128xbf16>
    %cst_9 = arith.constant dense<0.000000e+00> : vector<8x128xf32>
    %10 = tpu.matmul %8, %9, %cst_9 {dimension_numbers = #tpu.dot_dimension_numbers<[1], [0], [0], [1], [0, 0, 1, 1], [], []>} : vector<8x24xbf16>, vector<24x128xbf16>, vector<8x128xf32> -> vector<8x128xf32>
    %c0_10 = arith.constant 0 : index
    %c0_11 = arith.constant 0 : index
    %11 = vector.load %arg8[%c0_10, %c0_11] : memref<1x128xf32, #tpu.memory_space<vmem>>, vector<1x128xf32>
    %12 = vector.broadcast %11 : vector<1x128xf32> to vector<8x128xf32>
    %13 = arith.addf %10, %12 : vector<8x128xf32>
    %14 = tpu.iota {dimensions = array<i32: 1>} : vector<8x128xi32>
    %c64_i32 = arith.constant 64 : i32
    %15 = vector.broadcast %c64_i32 : i32 to vector<8x128xi32>
    %16 = arith.cmpi sge, %14, %15 : vector<8x128xi32>
    %c96_i32 = arith.constant 96 : i32
    %17 = vector.broadcast %c96_i32 : i32 to vector<8x128xi32>
    %18 = arith.cmpi slt, %14, %17 : vector<8x128xi32>
    %19 = arith.andi %16, %18 : vector<8x128xi1>
    %cst_12 = arith.constant 1.000000e+00 : f32
    %cst_13 = arith.constant 5.000000e-01 : f32
    %20 = vector.broadcast %cst_12 : f32 to vector<8x128xf32>
    %21 = vector.broadcast %cst_13 : f32 to vector<8x128xf32>
    %22 = arith.select %19, %20, %21 : vector<8x128xi1>, vector<8x128xf32>
    %cst_14 = arith.constant 0.000000e+00 : f32
    %cst_15 = arith.constant 5.000000e-01 : f32
    %23 = vector.broadcast %cst_14 : f32 to vector<8x128xf32>
    %24 = vector.broadcast %cst_15 : f32 to vector<8x128xf32>
    %25 = arith.select %19, %23, %24 : vector<8x128xi1>, vector<8x128xf32>
    %c0_16 = arith.constant 0 : index
    %c0_17 = arith.constant 0 : index
    %26 = vector.load %arg1[%c0_16, %c0_17] : memref<8x1xi32, #tpu.memory_space<vmem>>, vector<8x1xi32>
    %27 = vector.shape_cast %26 : vector<8x1xi32> to vector<8x1xi32>
    %28 = vector.broadcast %27 : vector<8x1xi32> to vector<8x32xi32>
    %c0_18 = arith.constant 0 : index
    %c0_19 = arith.constant 0 : index
    %29 = vector.load %arg4[%c0_18, %c0_19] : memref<32x128xbf16, #tpu.memory_space<vmem>>, vector<32x128xbf16>
    %cst_20 = arith.constant 0.000000e+00 : f32
    %30 = vector.broadcast %cst_20 : f32 to vector<8x32xf32>
    %cst_21 = arith.constant 0.000000e+00 : f32
    %31 = vector.broadcast %cst_21 : f32 to vector<8x32xf32>
    %32 = vector.extract_strided_slice %6 {offsets = [0, 0], sizes = [8, 128], strides = [1, 1]} : vector<64x128xf32> to vector<8x128xf32>
    %33 = arith.truncf %30 : vector<8x32xf32> to vector<8x32xbf16>
    %cst_22 = arith.constant dense<0.000000e+00> : vector<8x128xf32>
    %34 = tpu.matmul %33, %29, %cst_22 {dimension_numbers = #tpu.dot_dimension_numbers<[1], [0], [0], [1], [0, 0, 1, 1], [], []>} : vector<8x32xbf16>, vector<32x128xbf16>, vector<8x128xf32> -> vector<8x128xf32>
    %35 = arith.addf %32, %34 : vector<8x128xf32>
    %36 = arith.mulf %35, %22 : vector<8x128xf32>
    %37 = math.tanh %36 : vector<8x128xf32>
    %38 = arith.mulf %22, %37 : vector<8x128xf32>
    %39 = arith.addf %38, %25 : vector<8x128xf32>
    %40 = vector.extract_strided_slice %39 {offsets = [0, 0], sizes = [8, 32], strides = [1, 1]} : vector<8x128xf32> to vector<8x32xf32>
    %41 = vector.extract_strided_slice %39 {offsets = [0, 32], sizes = [8, 32], strides = [1, 1]} : vector<8x128xf32> to vector<8x32xf32>
    %42 = vector.extract_strided_slice %39 {offsets = [0, 64], sizes = [8, 32], strides = [1, 1]} : vector<8x128xf32> to vector<8x32xf32>
    %43 = vector.extract_strided_slice %39 {offsets = [0, 96], sizes = [8, 32], strides = [1, 1]} : vector<8x128xf32> to vector<8x32xf32>
    %44 = arith.mulf %41, %31 : vector<8x32xf32>
    %45 = arith.mulf %40, %42 : vector<8x32xf32>
    %46 = arith.addf %44, %45 : vector<8x32xf32>
    %47 = math.tanh %46 : vector<8x32xf32>
    %48 = arith.mulf %43, %47 : vector<8x32xf32>
    %c0_i32 = arith.constant 0 : i32
    %49 = vector.broadcast %c0_i32 : i32 to vector<8x32xi32>
    %50 = arith.cmpi sgt, %28, %49 : vector<8x32xi32>
    %51 = arith.select %50, %48, %30 : vector<8x32xi1>, vector<8x32xf32>
    %52 = arith.select %50, %46, %31 : vector<8x32xi1>, vector<8x32xf32>
    %53 = vector.extract_strided_slice %6 {offsets = [8, 0], sizes = [8, 128], strides = [1, 1]} : vector<64x128xf32> to vector<8x128xf32>
    %54 = arith.truncf %51 : vector<8x32xf32> to vector<8x32xbf16>
    %cst_23 = arith.constant dense<0.000000e+00> : vector<8x128xf32>
    %55 = tpu.matmul %54, %29, %cst_23 {dimension_numbers = #tpu.dot_dimension_numbers<[1], [0], [0], [1], [0, 0, 1, 1], [], []>} : vector<8x32xbf16>, vector<32x128xbf16>, vector<8x128xf32> -> vector<8x128xf32>
    %56 = arith.addf %53, %55 : vector<8x128xf32>
    %57 = arith.mulf %56, %22 : vector<8x128xf32>
    %58 = math.tanh %57 : vector<8x128xf32>
    %59 = arith.mulf %22, %58 : vector<8x128xf32>
    %60 = arith.addf %59, %25 : vector<8x128xf32>
    %61 = vector.extract_strided_slice %60 {offsets = [0, 0], sizes = [8, 32], strides = [1, 1]} : vector<8x128xf32> to vector<8x32xf32>
    %62 = vector.extract_strided_slice %60 {offsets = [0, 32], sizes = [8, 32], strides = [1, 1]} : vector<8x128xf32> to vector<8x32xf32>
    %63 = vector.extract_strided_slice %60 {offsets = [0, 64], sizes = [8, 32], strides = [1, 1]} : vector<8x128xf32> to vector<8x32xf32>
    %64 = vector.extract_strided_slice %60 {offsets = [0, 96], sizes = [8, 32], strides = [1, 1]} : vector<8x128xf32> to vector<8x32xf32>
    %65 = arith.mulf %62, %52 : vector<8x32xf32>
    %66 = arith.mulf %61, %63 : vector<8x32xf32>
    %67 = arith.addf %65, %66 : vector<8x32xf32>
    %68 = math.tanh %67 : vector<8x32xf32>
    %69 = arith.mulf %64, %68 : vector<8x32xf32>
    %c1_i32 = arith.constant 1 : i32
    %70 = vector.broadcast %c1_i32 : i32 to vector<8x32xi32>
    %71 = arith.cmpi sgt, %28, %70 : vector<8x32xi32>
    %72 = arith.select %71, %69, %51 : vector<8x32xi1>, vector<8x32xf32>
    %73 = arith.select %71, %67, %52 : vector<8x32xi1>, vector<8x32xf32>
    %74 = vector.extract_strided_slice %6 {offsets = [16, 0], sizes = [8, 128], strides = [1, 1]} : vector<64x128xf32> to vector<8x128xf32>
    %75 = arith.truncf %72 : vector<8x32xf32> to vector<8x32xbf16>
    %cst_24 = arith.constant dense<0.000000e+00> : vector<8x128xf32>
    %76 = tpu.matmul %75, %29, %cst_24 {dimension_numbers = #tpu.dot_dimension_numbers<[1], [0], [0], [1], [0, 0, 1, 1], [], []>} : vector<8x32xbf16>, vector<32x128xbf16>, vector<8x128xf32> -> vector<8x128xf32>
    %77 = arith.addf %74, %76 : vector<8x128xf32>
    %78 = arith.mulf %77, %22 : vector<8x128xf32>
    %79 = math.tanh %78 : vector<8x128xf32>
    %80 = arith.mulf %22, %79 : vector<8x128xf32>
    %81 = arith.addf %80, %25 : vector<8x128xf32>
    %82 = vector.extract_strided_slice %81 {offsets = [0, 0], sizes = [8, 32], strides = [1, 1]} : vector<8x128xf32> to vector<8x32xf32>
    %83 = vector.extract_strided_slice %81 {offsets = [0, 32], sizes = [8, 32], strides = [1, 1]} : vector<8x128xf32> to vector<8x32xf32>
    %84 = vector.extract_strided_slice %81 {offsets = [0, 64], sizes = [8, 32], strides = [1, 1]} : vector<8x128xf32> to vector<8x32xf32>
    %85 = vector.extract_strided_slice %81 {offsets = [0, 96], sizes = [8, 32], strides = [1, 1]} : vector<8x128xf32> to vector<8x32xf32>
    %86 = arith.mulf %83, %73 : vector<8x32xf32>
    %87 = arith.mulf %82, %84 : vector<8x32xf32>
    %88 = arith.addf %86, %87 : vector<8x32xf32>
    %89 = math.tanh %88 : vector<8x32xf32>
    %90 = arith.mulf %85, %89 : vector<8x32xf32>
    %c2_i32 = arith.constant 2 : i32
    %91 = vector.broadcast %c2_i32 : i32 to vector<8x32xi32>
    %92 = arith.cmpi sgt, %28, %91 : vector<8x32xi32>
    %93 = arith.select %92, %90, %72 : vector<8x32xi1>, vector<8x32xf32>
    %94 = arith.select %92, %88, %73 : vector<8x32xi1>, vector<8x32xf32>
    %95 = vector.extract_strided_slice %6 {offsets = [24, 0], sizes = [8, 128], strides = [1, 1]} : vector<64x128xf32> to vector<8x128xf32>
    %96 = arith.truncf %93 : vector<8x32xf32> to vector<8x32xbf16>
    %cst_25 = arith.constant dense<0.000000e+00> : vector<8x128xf32>
    %97 = tpu.matmul %96, %29, %cst_25 {dimension_numbers = #tpu.dot_dimension_numbers<[1], [0], [0], [1], [0, 0, 1, 1], [], []>} : vector<8x32xbf16>, vector<32x128xbf16>, vector<8x128xf32> -> vector<8x128xf32>
    %98 = arith.addf %95, %97 : vector<8x128xf32>
    %99 = arith.mulf %98, %22 : vector<8x128xf32>
    %100 = math.tanh %99 : vector<8x128xf32>
    %101 = arith.mulf %22, %100 : vector<8x128xf32>
    %102 = arith.addf %101, %25 : vector<8x128xf32>
    %103 = vector.extract_strided_slice %102 {offsets = [0, 0], sizes = [8, 32], strides = [1, 1]} : vector<8x128xf32> to vector<8x32xf32>
    %104 = vector.extract_strided_slice %102 {offsets = [0, 32], sizes = [8, 32], strides = [1, 1]} : vector<8x128xf32> to vector<8x32xf32>
    %105 = vector.extract_strided_slice %102 {offsets = [0, 64], sizes = [8, 32], strides = [1, 1]} : vector<8x128xf32> to vector<8x32xf32>
    %106 = vector.extract_strided_slice %102 {offsets = [0, 96], sizes = [8, 32], strides = [1, 1]} : vector<8x128xf32> to vector<8x32xf32>
    %107 = arith.mulf %104, %94 : vector<8x32xf32>
    %108 = arith.mulf %103, %105 : vector<8x32xf32>
    %109 = arith.addf %107, %108 : vector<8x32xf32>
    %110 = math.tanh %109 : vector<8x32xf32>
    %111 = arith.mulf %106, %110 : vector<8x32xf32>
    %c3_i32 = arith.constant 3 : i32
    %112 = vector.broadcast %c3_i32 : i32 to vector<8x32xi32>
    %113 = arith.cmpi sgt, %28, %112 : vector<8x32xi32>
    %114 = arith.select %113, %111, %93 : vector<8x32xi1>, vector<8x32xf32>
    %115 = arith.select %113, %109, %94 : vector<8x32xi1>, vector<8x32xf32>
    %116 = vector.extract_strided_slice %6 {offsets = [32, 0], sizes = [8, 128], strides = [1, 1]} : vector<64x128xf32> to vector<8x128xf32>
    %117 = arith.truncf %114 : vector<8x32xf32> to vector<8x32xbf16>
    %cst_26 = arith.constant dense<0.000000e+00> : vector<8x128xf32>
    %118 = tpu.matmul %117, %29, %cst_26 {dimension_numbers = #tpu.dot_dimension_numbers<[1], [0], [0], [1], [0, 0, 1, 1], [], []>} : vector<8x32xbf16>, vector<32x128xbf16>, vector<8x128xf32> -> vector<8x128xf32>
    %119 = arith.addf %116, %118 : vector<8x128xf32>
    %120 = arith.mulf %119, %22 : vector<8x128xf32>
    %121 = math.tanh %120 : vector<8x128xf32>
    %122 = arith.mulf %22, %121 : vector<8x128xf32>
    %123 = arith.addf %122, %25 : vector<8x128xf32>
    %124 = vector.extract_strided_slice %123 {offsets = [0, 0], sizes = [8, 32], strides = [1, 1]} : vector<8x128xf32> to vector<8x32xf32>
    %125 = vector.extract_strided_slice %123 {offsets = [0, 32], sizes = [8, 32], strides = [1, 1]} : vector<8x128xf32> to vector<8x32xf32>
    %126 = vector.extract_strided_slice %123 {offsets = [0, 64], sizes = [8, 32], strides = [1, 1]} : vector<8x128xf32> to vector<8x32xf32>
    %127 = vector.extract_strided_slice %123 {offsets = [0, 96], sizes = [8, 32], strides = [1, 1]} : vector<8x128xf32> to vector<8x32xf32>
    %128 = arith.mulf %125, %115 : vector<8x32xf32>
    %129 = arith.mulf %124, %126 : vector<8x32xf32>
    %130 = arith.addf %128, %129 : vector<8x32xf32>
    %131 = math.tanh %130 : vector<8x32xf32>
    %132 = arith.mulf %127, %131 : vector<8x32xf32>
    %c4_i32 = arith.constant 4 : i32
    %133 = vector.broadcast %c4_i32 : i32 to vector<8x32xi32>
    %134 = arith.cmpi sgt, %28, %133 : vector<8x32xi32>
    %135 = arith.select %134, %132, %114 : vector<8x32xi1>, vector<8x32xf32>
    %136 = arith.select %134, %130, %115 : vector<8x32xi1>, vector<8x32xf32>
    %137 = vector.extract_strided_slice %6 {offsets = [40, 0], sizes = [8, 128], strides = [1, 1]} : vector<64x128xf32> to vector<8x128xf32>
    %138 = arith.truncf %135 : vector<8x32xf32> to vector<8x32xbf16>
    %cst_27 = arith.constant dense<0.000000e+00> : vector<8x128xf32>
    %139 = tpu.matmul %138, %29, %cst_27 {dimension_numbers = #tpu.dot_dimension_numbers<[1], [0], [0], [1], [0, 0, 1, 1], [], []>} : vector<8x32xbf16>, vector<32x128xbf16>, vector<8x128xf32> -> vector<8x128xf32>
    %140 = arith.addf %137, %139 : vector<8x128xf32>
    %141 = arith.mulf %140, %22 : vector<8x128xf32>
    %142 = math.tanh %141 : vector<8x128xf32>
    %143 = arith.mulf %22, %142 : vector<8x128xf32>
    %144 = arith.addf %143, %25 : vector<8x128xf32>
    %145 = vector.extract_strided_slice %144 {offsets = [0, 0], sizes = [8, 32], strides = [1, 1]} : vector<8x128xf32> to vector<8x32xf32>
    %146 = vector.extract_strided_slice %144 {offsets = [0, 32], sizes = [8, 32], strides = [1, 1]} : vector<8x128xf32> to vector<8x32xf32>
    %147 = vector.extract_strided_slice %144 {offsets = [0, 64], sizes = [8, 32], strides = [1, 1]} : vector<8x128xf32> to vector<8x32xf32>
    %148 = vector.extract_strided_slice %144 {offsets = [0, 96], sizes = [8, 32], strides = [1, 1]} : vector<8x128xf32> to vector<8x32xf32>
    %149 = arith.mulf %146, %136 : vector<8x32xf32>
    %150 = arith.mulf %145, %147 : vector<8x32xf32>
    %151 = arith.addf %149, %150 : vector<8x32xf32>
    %152 = math.tanh %151 : vector<8x32xf32>
    %153 = arith.mulf %148, %152 : vector<8x32xf32>
    %c5_i32 = arith.constant 5 : i32
    %154 = vector.broadcast %c5_i32 : i32 to vector<8x32xi32>
    %155 = arith.cmpi sgt, %28, %154 : vector<8x32xi32>
    %156 = arith.select %155, %153, %135 : vector<8x32xi1>, vector<8x32xf32>
    %157 = arith.select %155, %151, %136 : vector<8x32xi1>, vector<8x32xf32>
    %158 = vector.extract_strided_slice %6 {offsets = [48, 0], sizes = [8, 128], strides = [1, 1]} : vector<64x128xf32> to vector<8x128xf32>
    %159 = arith.truncf %156 : vector<8x32xf32> to vector<8x32xbf16>
    %cst_28 = arith.constant dense<0.000000e+00> : vector<8x128xf32>
    %160 = tpu.matmul %159, %29, %cst_28 {dimension_numbers = #tpu.dot_dimension_numbers<[1], [0], [0], [1], [0, 0, 1, 1], [], []>} : vector<8x32xbf16>, vector<32x128xbf16>, vector<8x128xf32> -> vector<8x128xf32>
    %161 = arith.addf %158, %160 : vector<8x128xf32>
    %162 = arith.mulf %161, %22 : vector<8x128xf32>
    %163 = math.tanh %162 : vector<8x128xf32>
    %164 = arith.mulf %22, %163 : vector<8x128xf32>
    %165 = arith.addf %164, %25 : vector<8x128xf32>
    %166 = vector.extract_strided_slice %165 {offsets = [0, 0], sizes = [8, 32], strides = [1, 1]} : vector<8x128xf32> to vector<8x32xf32>
    %167 = vector.extract_strided_slice %165 {offsets = [0, 32], sizes = [8, 32], strides = [1, 1]} : vector<8x128xf32> to vector<8x32xf32>
    %168 = vector.extract_strided_slice %165 {offsets = [0, 64], sizes = [8, 32], strides = [1, 1]} : vector<8x128xf32> to vector<8x32xf32>
    %169 = vector.extract_strided_slice %165 {offsets = [0, 96], sizes = [8, 32], strides = [1, 1]} : vector<8x128xf32> to vector<8x32xf32>
    %170 = arith.mulf %167, %157 : vector<8x32xf32>
    %171 = arith.mulf %166, %168 : vector<8x32xf32>
    %172 = arith.addf %170, %171 : vector<8x32xf32>
    %173 = math.tanh %172 : vector<8x32xf32>
    %174 = arith.mulf %169, %173 : vector<8x32xf32>
    %c6_i32 = arith.constant 6 : i32
    %175 = vector.broadcast %c6_i32 : i32 to vector<8x32xi32>
    %176 = arith.cmpi sgt, %28, %175 : vector<8x32xi32>
    %177 = arith.select %176, %174, %156 : vector<8x32xi1>, vector<8x32xf32>
    %178 = arith.select %176, %172, %157 : vector<8x32xi1>, vector<8x32xf32>
    %179 = vector.extract_strided_slice %6 {offsets = [56, 0], sizes = [8, 128], strides = [1, 1]} : vector<64x128xf32> to vector<8x128xf32>
    %180 = arith.truncf %177 : vector<8x32xf32> to vector<8x32xbf16>
    %cst_29 = arith.constant dense<0.000000e+00> : vector<8x128xf32>
    %181 = tpu.matmul %180, %29, %cst_29 {dimension_numbers = #tpu.dot_dimension_numbers<[1], [0], [0], [1], [0, 0, 1, 1], [], []>} : vector<8x32xbf16>, vector<32x128xbf16>, vector<8x128xf32> -> vector<8x128xf32>
    %182 = arith.addf %179, %181 : vector<8x128xf32>
    %183 = arith.mulf %182, %22 : vector<8x128xf32>
    %184 = math.tanh %183 : vector<8x128xf32>
    %185 = arith.mulf %22, %184 : vector<8x128xf32>
    %186 = arith.addf %185, %25 : vector<8x128xf32>
    %187 = vector.extract_strided_slice %186 {offsets = [0, 0], sizes = [8, 32], strides = [1, 1]} : vector<8x128xf32> to vector<8x32xf32>
    %188 = vector.extract_strided_slice %186 {offsets = [0, 32], sizes = [8, 32], strides = [1, 1]} : vector<8x128xf32> to vector<8x32xf32>
    %189 = vector.extract_strided_slice %186 {offsets = [0, 64], sizes = [8, 32], strides = [1, 1]} : vector<8x128xf32> to vector<8x32xf32>
    %190 = vector.extract_strided_slice %186 {offsets = [0, 96], sizes = [8, 32], strides = [1, 1]} : vector<8x128xf32> to vector<8x32xf32>
    %191 = arith.mulf %188, %178 : vector<8x32xf32>
    %192 = arith.mulf %187, %189 : vector<8x32xf32>
    %193 = arith.addf %191, %192 : vector<8x32xf32>
    %194 = math.tanh %193 : vector<8x32xf32>
    %195 = arith.mulf %190, %194 : vector<8x32xf32>
    %c7_i32 = arith.constant 7 : i32
    %196 = vector.broadcast %c7_i32 : i32 to vector<8x32xi32>
    %197 = arith.cmpi sgt, %28, %196 : vector<8x32xi32>
    %198 = arith.select %197, %195, %177 : vector<8x32xi1>, vector<8x32xf32>
    %199 = arith.truncf %198 : vector<8x32xf32> to vector<8x32xbf16>
    %c0_30 = arith.constant 0 : index
    %c0_31 = arith.constant 0 : index
    %200 = vector.load %arg6[%c0_30, %c0_31] : memref<32x128xbf16, #tpu.memory_space<vmem>>, vector<32x128xbf16>
    %cst_32 = arith.constant dense<0.000000e+00> : vector<8x128xf32>
    %201 = tpu.matmul %199, %200, %cst_32 {dimension_numbers = #tpu.dot_dimension_numbers<[1], [0], [0], [1], [0, 0, 1, 1], [], []>} : vector<8x32xbf16>, vector<32x128xbf16>, vector<8x128xf32> -> vector<8x128xf32>
    %202 = arith.addf %201, %13 : vector<8x128xf32>
    %cst_33 = arith.constant 0.000000e+00 : f32
    %203 = vector.broadcast %cst_33 : f32 to vector<8x128xf32>
    %204 = arith.maximumf %202, %203 : vector<8x128xf32>
    %205 = arith.truncf %204 : vector<8x128xf32> to vector<8x128xbf16>
    %c0_34 = arith.constant 0 : index
    %c0_35 = arith.constant 0 : index
    %206 = vector.load %arg9[%c0_34, %c0_35] : memref<128x128xbf16, #tpu.memory_space<vmem>>, vector<128x128xbf16>
    %cst_36 = arith.constant dense<0.000000e+00> : vector<8x128xf32>
    %207 = tpu.matmul %205, %206, %cst_36 {dimension_numbers = #tpu.dot_dimension_numbers<[1], [0], [0], [1], [0, 0, 1, 1], [], []>} : vector<8x128xbf16>, vector<128x128xbf16>, vector<8x128xf32> -> vector<8x128xf32>
    %c0_37 = arith.constant 0 : index
    %c0_38 = arith.constant 0 : index
    %208 = vector.load %arg10[%c0_37, %c0_38] : memref<1x128xf32, #tpu.memory_space<vmem>>, vector<1x128xf32>
    %209 = vector.broadcast %208 : vector<1x128xf32> to vector<8x128xf32>
    %210 = arith.addf %207, %209 : vector<8x128xf32>
    %c0_39 = arith.constant 0 : index
    %c0_40 = arith.constant 0 : index
    %211 = vector.load %arg11[%c0_39, %c0_40] : memref<8x128xf32, #tpu.memory_space<vmem>>, vector<8x128xf32>
    tpu.vector_store %arg11[%c0_39, %c0_40], %210 {strides = array<i32>} : memref<8x128xf32, #tpu.memory_space<vmem>>, vector<8x128xf32>,
    return
  }
}

</mosaic_0001>

<llo_original>
// kernel: tpu_custom_call.1
$region0: #{tpu_custom_call.1}
  #allocation0 [shape = 'u32[]', space=smem, size = 0x4, offset = 0x4, fixed_abs, tag = 'smem constant byte address 0x4 - core index']
  #allocation1 [shape = 'u32[144,128]{1,0:T(1,128)}', space=vmem, size = 0x12000, scoped, tag = 'internal scratch']
  %s0 = inlined_call_operand.vmem [shape: f32[64,32], index: 0, kind: input, shape index: {}]
  %s1 = inlined_call_operand.vmem [shape: s32[8,1], index: 1, kind: input, shape index: {}]
  %s2 = inlined_call_operand.vmem [shape: bf16[32,128], index: 2, kind: input, shape index: {}]
  %s3 = inlined_call_operand.vmem [shape: f32[1,128], index: 3, kind: input, shape index: {}]
  %s4 = inlined_call_operand.vmem [shape: bf16[32,128], index: 4, kind: input, shape index: {}]
  %s5 = inlined_call_operand.vmem [shape: f32[8,24], index: 5, kind: input, shape index: {}]
  %s6 = inlined_call_operand.vmem [shape: bf16[32,128], index: 6, kind: input, shape index: {}]
  %s7 = inlined_call_operand.hbm [shape: bf16[24,128], index: 7, kind: input, shape index: {}]
  %s8 = inlined_call_operand.hbm [shape: f32[1,128], index: 8, kind: input, shape index: {}]
  %s9 = inlined_call_operand.vmem [shape: bf16[128,128], index: 9, kind: input, shape index: {}]
  %s10 = inlined_call_operand.vmem [shape: f32[1,128], index: 10, kind: input, shape index: {}]
  %s11 = inlined_call_operand.hbm [shape: f32[8,128], index: 11, kind: output, shape index: {}]
  %s12 = sld [smem:[#allocation0]]
  $region62: #{tpu_custom_call.1} parent=0
    _
  %s14 = ssub.s32 1, %s12
  %s15 = scalar_select 0, %s14, %s12
  $region1: #{tpu_custom_call.1} parent=0
    #allocation2 [shape = 'u8[6144]{0}', space=vmem, size = 0x1800, scoped, tag = 'input window, operand 7, single buffered']
    #allocation3 [shape = 's32[1]{0}', space=sflag, size = 0x4, scoped, tag = 'scoped memory for tpu_custom_call.1']
    #allocation4 [shape = 's32[1]{0}', space=sflag, size = 0x4, scoped, tag = 'scoped memory for tpu_custom_call.1']
    #allocation5 [shape = 'u8[512]{0}', space=vmem, size = 0x400, scoped, tag = 'input window, operand 8, single buffered']
    #allocation6 [shape = 's32[1]{0}', space=sflag, size = 0x4, scoped, tag = 'scoped memory for tpu_custom_call.1']
    #allocation7 [shape = 'u8[4096]{0}', space=vmem, size = 0x1000, scoped, tag = 'output window, operand 0, single buffered']
    %16 = vsyncpa [#allocation3], 0
    %17 = vsyncpa [#allocation6], 0
    %18 = vsyncpa [#allocation4], 0
    // Predicated region
    $region2: #{tpu_custom_call.1} parent=1 // pred_check
      _
    $region3: #{tpu_custom_call.1} parent=1 // pred_check_branch
      %20 = sbr.rel (0) target = $region5
    $region4: #{tpu_custom_call.1} parent=1 // pred_region
      _
    $region5: #{tpu_custom_call.1} parent=1 // pred_fallthru
      _
    // Predicated region
    $region6: #{tpu_custom_call.1} parent=1 // pred_check
      _
    $region7: #{tpu_custom_call.1} parent=1 // pred_check_branch
      %22 = sbr.rel (0) target = $region9
    $region8: #{tpu_custom_call.1} parent=1 // pred_region
      _
    $region9: #{tpu_custom_call.1} parent=1 // pred_fallthru
      _
    // Predicated region
    $region10: #{tpu_custom_call.1} parent=1 // pred_check
      _
    $region11: #{tpu_custom_call.1} parent=1 // pred_check_branch
      %24 = sbr.rel (0) target = $region13
    $region12: #{tpu_custom_call.1} parent=1 // pred_region
      _
    $region13: #{tpu_custom_call.1} parent=1 // pred_fallthru
      _
    // Predicated region
    $region14: #{tpu_custom_call.1} parent=1 // pred_check
      _
    $region15: #{tpu_custom_call.1} parent=1 // pred_check_branch
      %26 = sbr.rel (0) target = $region17
    $region16: #{tpu_custom_call.1} parent=1 // pred_region
      _
    $region17: #{tpu_custom_call.1} parent=1 // pred_fallthru
      _
    // Predicated region
    $region18: #{tpu_custom_call.1} parent=1 // pred_check
      _
    $region19: #{tpu_custom_call.1} parent=1 // pred_check_branch
      %28 = sbr.rel (0) target = $region21
    $region20: #{tpu_custom_call.1} parent=1 // pred_region
      _
    $region21: #{tpu_custom_call.1} parent=1 // pred_fallthru
      _
    // Predicated region
    $region22: #{tpu_custom_call.1} parent=1 // pred_check
      _
    $region23: #{tpu_custom_call.1} parent=1 // pred_check_branch
      %30 = sbr.rel (0) target = $region25
    $region24: #{tpu_custom_call.1} parent=1 // pred_region
      _
    $region25: #{tpu_custom_call.1} parent=1 // pred_fallthru
      _
    // Predicated region
    $region26: #{tpu_custom_call.1} parent=1 // pred_check
      _
    $region27: #{tpu_custom_call.1} parent=1 // pred_check_branch
      %32 = sbr.rel (0) target = $region29
    $region28: #{tpu_custom_call.1} parent=1 // pred_region
      _
    $region29: #{tpu_custom_call.1} parent=1 // pred_fallthru
      _
    // Predicated region
    $region30: #{tpu_custom_call.1} parent=1 // pred_check
      _
    $region31: #{tpu_custom_call.1} parent=1 // pred_check_branch
      %34 = sbr.rel (0) target = $region33
    $region32: #{tpu_custom_call.1} parent=1 // pred_region
      %s36 = ssub.s32 192, 192
      %37 = vsyncadd [#allocation3], %s36
      %s38 = sshll.u32 [#allocation2], 4
      %s39 = int_to_ptr.vmem [resolvable:$true] %s38
      %44 = dma.hbm_to_vmem [thread:$0]  %s7, 192, %s39, [#allocation3], 64, 64, 4
    $region33: #{tpu_custom_call.1} parent=1 // pred_fallthru
      _
    // Predicated region
    $region34: #{tpu_custom_call.1} parent=1 // pred_check
      _
    $region35: #{tpu_custom_call.1} parent=1 // pred_check_branch
      %46 = sbr.rel (0) target = $region37
    $region36: #{tpu_custom_call.1} parent=1 // pred_region
      %s48 = ssub.s32 16, 16
      %49 = vsyncadd [#allocation6], %s48
      %s51 = sshll.u32 [#allocation5], 4
      %s52 = int_to_ptr.vmem [resolvable:$true] %s51
      %54 = dma.hbm_to_vmem [thread:$0]  %s8, 16, %s52, [#allocation6]
    $region37: #{tpu_custom_call.1} parent=1 // pred_fallthru
      _
    // Predicated region
    $region38: #{tpu_custom_call.1} parent=1 // pred_check
      _
    $region39: #{tpu_custom_call.1} parent=1 // pred_check_branch
      %56 = sbr.rel (0) target = $region41
    $region40: #{tpu_custom_call.1} parent=1 // pred_region
      _
    $region41: #{tpu_custom_call.1} parent=1 // pred_fallthru
      _
    // Predicated region
    $region42: #{tpu_custom_call.1} parent=1 // pred_check
      _
    $region43: #{tpu_custom_call.1} parent=1 // pred_check_branch
      %58 = sbr.rel (0) target = $region45
    $region44: #{tpu_custom_call.1} parent=1 // pred_region
      _
    $region45: #{tpu_custom_call.1} parent=1 // pred_fallthru
      _
    // Predicated region
    $region46: #{tpu_custom_call.1} parent=1 // pred_check
      _
    $region47: #{tpu_custom_call.1} parent=1 // pred_check_branch
      %60 = sbr.rel (0) target = $region49
    $region48: #{tpu_custom_call.1} parent=1 // pred_region
      %61 = dma.done [#allocation3], 192
    $region49: #{tpu_custom_call.1} parent=1 // pred_fallthru
      _
    // Predicated region
    $region50: #{tpu_custom_call.1} parent=1 // pred_check
      _
    $region51: #{tpu_custom_call.1} parent=1 // pred_check_branch
      %63 = sbr.rel (0) target = $region53
    $region52: #{tpu_custom_call.1} parent=1 // pred_region
      %64 = dma.done [#allocation6], 16
    $region53: #{tpu_custom_call.1} parent=1 // pred_fallthru
      _
    %v66 = vld [vmem:[%s0] sm:$0xff]
    %v67 = vld [vmem:[%s0 + $0x8] sm:$0xff]
    %v68 = vld [vmem:[%s0 + $0x10] sm:$0xff]
    %v69 = vld [vmem:[%s0 + $0x18] sm:$0xff]
    %v70 = vld [vmem:[%s0 + $0x20] sm:$0xff]
    %v71 = vld [vmem:[%s0 + $0x28] sm:$0xff]
    %v72 = vld [vmem:[%s0 + $0x30] sm:$0xff]
    %v73 = vld [vmem:[%s0 + $0x38] sm:$0xff]
    %v74 = vpack.c.bf16 %v67, %v66
    %v75 = vpack.c.bf16 %v69, %v68
    %v76 = vpack.c.bf16 %v71, %v70
    %v77 = vpack.c.bf16 %v73, %v72
    %v78 = vld [vmem:[%s2] sm:$0xf]
    %v79 = vld [vmem:[%s2 + $0x4] sm:$0xf]
    %v80 = vld [vmem:[%s2 + $0x8] sm:$0xf]
    %v81 = vld [vmem:[%s2 + $0xc] sm:$0xf]
    %v82 = vld [vmem:[%s3] sm:$0x1]
    %v84 = vlaneseq
    %v85 = vshrl.u32 %v84, 7
    %v86 = vsub.s32 0, %v85
    %v87 = vrot.slane %v82, %v86
    %v93 = vunpack.c.l.b16 %v78
    %v94 = vunpack.c.l.b16 %v79
    %v95 = vunpack.c.l.b16 %v80
    %v96 = vunpack.c.l.b16 %v81
    %v97 = vpack.c.b16 %v94, %v93
    %v98 = vpack.c.b16 %v96, %v95
    %vm101 = vcmask 261120
    %v103 = vsel %vm101, %v74, 0
    %v106 = vsel %vm101, %v75, 0
    %v109 = vsel %vm101, %v76, 0
    %v112 = vsel %vm101, %v77, 0
    %114 = vmatprep.subr.bf16.mxu0 0
    %115 = vmatpush1.bf16.msra.mxu0 0
    %116 = vmatprep.subr.bf16.mxu0 0
    %117 = vmatpush1.bf16.msra.mxu0 0
    %118 = vmatprep.subr.bf16.mxu0 0
    %119 = vmatpush1.bf16.msra.mxu0 0
    %120 = vmatprep.subr.bf16.mxu0 0
    %121 = vmatpush1.bf16.msra.mxu0 0
    %122 = vmatprep.subr.bf16.mxu0 0
    %123 = vmatpush1.bf16.msra.mxu0 0
    %124 = vmatprep.subr.bf16.mxu0 0
    %125 = vmatpush1.bf16.msra.mxu0 0
    %126 = vmatprep.subr.bf16.mxu0 0
    %127 = vmatpush1.bf16.msra.mxu0 %v98
    %128 = vmatprep.subr.bf16.mxu0 0
    %129 = vmatpush1.bf16.msra.mxu0 %v97
    %130 = vmatprep.subr.bf16.mxu0 0
    %131 = vmatpush2.bf16.msra.mxu0 0
    %132 = vmatprep.subr.bf16.mxu0 0
    %133 = vmatpush2.bf16.msra.mxu0 0
    %134 = vmatprep.subr.bf16.mxu0 0
    %135 = vmatpush2.bf16.msra.mxu0 0
    %136 = vmatprep.subr.bf16.mxu0 0
    %137 = vmatpush2.bf16.msra.mxu0 0
    %138 = vmatprep.subr.bf16.mxu0 0
    %139 = vmatpush2.bf16.msra.mxu0 0
    %140 = vmatprep.subr.bf16.mxu0 0
    %141 = vmatpush2.bf16.msra.mxu0 0
    %142 = vmatprep.subr.bf16.mxu0 0
    %143 = vmatpush2.bf16.msra.mxu0 0
    %144 = vmatprep.subr.bf16.mxu0 0
    %145 = vmatpush2.bf16.msra.mxu0 0
    %146 = vmatprep.mubr.bf16.mxu0 0
    %147 = vmatmul.mubr.bf16.gmra.mxu0 %v103
    %v148 = vpop.f32.mrf.mxu0
    %v149 = vadd.f32 %v87, %v148
    %v150 = vpop.f32.mrf.mxu0
    %v151 = vpop.f32.mrf.mxu0
    %v152 = vadd.f32 %v87, %v151
    %v153 = vpop.f32.mrf.mxu0
    %154 = vmatprep.mubr.bf16.mxu0 0
    %155 = vmatmul.mubr.bf16.gmra.mxu0 %v106
    %v156 = vpop.f32.mrf.mxu0
    %v157 = vadd.f32 %v87, %v156
    %v158 = vpop.f32.mrf.mxu0
    %v159 = vpop.f32.mrf.mxu0
    %v160 = vadd.f32 %v87, %v159
    %v161 = vpop.f32.mrf.mxu0
    %162 = vmatprep.mubr.bf16.mxu0 0
    %163 = vmatmul.mubr.bf16.gmra.mxu0 %v109
    %v164 = vpop.f32.mrf.mxu0
    %v165 = vadd.f32 %v87, %v164
    %v166 = vpop.f32.mrf.mxu0
    %v167 = vpop.f32.mrf.mxu0
    %v168 = vadd.f32 %v87, %v167
    %v169 = vpop.f32.mrf.mxu0
    %170 = vmatprep.mubr.bf16.mxu0 0
    %171 = vmatmul.mubr.bf16.gmra.mxu0 %v112
    %v172 = vpop.f32.mrf.mxu0
    %v173 = vadd.f32 %v87, %v172
    %v174 = vpop.f32.mrf.mxu0
    %v175 = vpop.f32.mrf.mxu0
    %v176 = vadd.f32 %v87, %v175
    %v177 = vpop.f32.mrf.mxu0
    %178 = vdwg.mxu0
    %v179 = vld [vmem:[%s5] sm:$0xff]
    %v180 = vpack.c.bf16 %v179, %v179
    %v181 = vld [vmem:[#allocation2] sm:$0xf]
    %v182 = vld [vmem:[#allocation2 + $0x4] sm:$0xf]
    %v183 = vld [vmem:[#allocation2 + $0x8] sm:$0xf]
    %v184 = vld [vmem:[#allocation5] sm:$0x1]
    %v186 = vlaneseq
    %v187 = vshrl.u32 %v186, 7
    %v188 = vsub.s32 0, %v187
    %v189 = vrot.slane %v184, %v188
    %v194 = vunpack.c.l.b16 %v181
    %v195 = vunpack.c.l.b16 %v182
    %v196 = vunpack.c.l.b16 %v183
    %v197 = vpack.c.b16 %v195, %v194
    %v198 = vpack.c.b16 %v196, %v196
    %vm200 = vcmask 195584
    %v202 = vsel %vm200, %v180, 0
    %vm204 = vcmask 1043456
    %v206 = vsel %vm204, %v198, 0
    %208 = vmatprep.subr.bf16.mxu0 0
    %209 = vmatpush1.bf16.msra.mxu0 0
    %210 = vmatprep.subr.bf16.mxu0 0
    %211 = vmatpush1.bf16.msra.mxu0 0
    %212 = vmatprep.subr.bf16.mxu0 0
    %213 = vmatpush1.bf16.msra.mxu0 0
    %214 = vmatprep.subr.bf16.mxu0 0
    %215 = vmatpush1.bf16.msra.mxu0 0
    %216 = vmatprep.subr.bf16.mxu0 0
    %217 = vmatpush1.bf16.msra.mxu0 0
    %218 = vmatprep.subr.bf16.mxu0 0
    %219 = vmatpush1.bf16.msra.mxu0 0
    %220 = vmatprep.subr.bf16.mxu0 0
    %221 = vmatpush1.bf16.msra.mxu0 %v206
    %222 = vmatprep.subr.bf16.mxu0 0
    %223 = vmatpush1.bf16.msra.mxu0 %v197
    %224 = vmatprep.subr.bf16.mxu0 0
    %225 = vmatpush2.bf16.msra.mxu0 0
    %226 = vmatprep.subr.bf16.mxu0 0
    %227 = vmatpush2.bf16.msra.mxu0 0
    %228 = vmatprep.subr.bf16.mxu0 0
    %229 = vmatpush2.bf16.msra.mxu0 0
    %230 = vmatprep.subr.bf16.mxu0 0
    %231 = vmatpush2.bf16.msra.mxu0 0
    %232 = vmatprep.subr.bf16.mxu0 0
    %233 = vmatpush2.bf16.msra.mxu0 0
    %234 = vmatprep.subr.bf16.mxu0 0
    %235 = vmatpush2.bf16.msra.mxu0 0
    %236 = vmatprep.subr.bf16.mxu0 0
    %237 = vmatpush2.bf16.msra.mxu0 0
    %238 = vmatprep.subr.bf16.mxu0 0
    %239 = vmatpush2.bf16.msra.mxu0 0
    %240 = vmatprep.mubr.bf16.mxu0 0
    %241 = vmatmul.mubr.bf16.gmra.mxu0 %v202
    %v242 = vpop.f32.mrf.mxu0
    %v243 = vadd.f32 %v189, %v242
    %v244 = vpop.f32.mrf.mxu0
    %v245 = vpop.f32.mrf.mxu0
    %v246 = vpop.f32.mrf.mxu0
    %247 = vdwg.mxu0
    %v248 = vlaneseq
    %v249 = vand.u32 %v248, 127
    %vm250 = vcmp.ge.s32.totalorder %v249, 64
    %vm251 = vcmp.lt.s32.totalorder %v249, 96
    %vm252 = vmand %vm250, %vm251
    %v253 = vsel %vm252, 1.0, 0.5
    %v254 = vsel %vm252, 0.0, 0.5
    %v255 = vld [vmem:[%s1] sm:$0xff]
    %256 = vset.pattern.permute.xlu0 0
    %257 = vperm.xlu0 %256, %v255
    %v258 = vpop.permute.xlu0 %257
    %v259 = vld [vmem:[%s4] sm:$0xf]
    %v260 = vld [vmem:[%s4 + $0x4] sm:$0xf]
    %v261 = vld [vmem:[%s4 + $0x8] sm:$0xf]
    %v262 = vld [vmem:[%s4 + $0xc] sm:$0xf]
    %v267 = vunpack.c.l.b16 %v259
    %v268 = vunpack.c.l.b16 %v260
    %v269 = vunpack.c.l.b16 %v261
    %v270 = vunpack.c.l.b16 %v262
    %v271 = vpack.c.b16 %v268, %v267
    %v272 = vpack.c.b16 %v270, %v269
    %v276 = vsel %vm101, 0, 0
    %278 = vmatprep.subr.bf16.mxu0 0
    %279 = vmatpush1.bf16.msra.mxu0 0
    %280 = vmatprep.subr.bf16.mxu0 0
    %281 = vmatpush1.bf16.msra.mxu0 0
    %282 = vmatprep.subr.bf16.mxu0 0
    %283 = vmatpush1.bf16.msra.mxu0 0
    %284 = vmatprep.subr.bf16.mxu0 0
    %285 = vmatpush1.bf16.msra.mxu0 0
    %286 = vmatprep.subr.bf16.mxu0 0
    %287 = vmatpush1.bf16.msra.mxu0 0
    %288 = vmatprep.subr.bf16.mxu0 0
    %289 = vmatpush1.bf16.msra.mxu0 0
    %290 = vmatprep.subr.bf16.mxu0 0
    %291 = vmatpush1.bf16.msra.mxu0 %v272
    %292 = vmatprep.subr.bf16.mxu0 0
    %293 = vmatpush1.bf16.msra.mxu0 %v271
    %294 = vmatprep.subr.bf16.mxu0 0
    %295 = vmatpush2.bf16.msra.mxu0 0
    %296 = vmatprep.subr.bf16.mxu0 0
    %297 = vmatpush2.bf16.msra.mxu0 0
    %298 = vmatprep.subr.bf16.mxu0 0
    %299 = vmatpush2.bf16.msra.mxu0 0
    %300 = vmatprep.subr.bf16.mxu0 0
    %301 = vmatpush2.bf16.msra.mxu0 0
    %302 = vmatprep.subr.bf16.mxu0 0
    %303 = vmatpush2.bf16.msra.mxu0 0
    %304 = vmatprep.subr.bf16.mxu0 0
    %305 = vmatpush2.bf16.msra.mxu0 0
    %306 = vmatprep.subr.bf16.mxu0 0
    %307 = vmatpush2.bf16.msra.mxu0 0
    %308 = vmatprep.subr.bf16.mxu0 0
    %309 = vmatpush2.bf16.msra.mxu0 0
    %310 = vmatprep.mubr.bf16.mxu0 0
    %311 = vmatmul.mubr.bf16.gmra.mxu0 %v276
    %v312 = vpop.f32.mrf.mxu0
    %v313 = vadd.f32 0.0, %v312
    %v314 = vpop.f32.mrf.mxu0
    %v315 = vpop.f32.mrf.mxu0
    %v316 = vpop.f32.mrf.mxu0
    %317 = vdwg.mxu0
    %v318 = vadd.f32 %v149, %v313
    %v319 = vmul.f32 %v318, %v253
    %v320 = vtanh.pop %v319
    %v321 = vmul.f32 %v253, %v320
    %v322 = vadd.f32 %v321, %v254
    %v323 = vmul.f32 %v322, 0.0
    %325 = vrot.lane.b32.xlu0 %v322, 64
    %v326 = vpop.permute.xlu0 %325
    %v328 = vmul.f32 %v322, %v326
    %330 = vrot.lane.b32.xlu0 %v328, 32
    %v331 = vpop.permute.xlu0 %330
    %v333 = vadd.f32 %v323, %v331
    %v334 = vtanh.pop %v333
    %336 = vrot.lane.b32.xlu0 %v334, 64
    %v337 = vpop.permute.xlu0 %336
    %v339 = vmul.f32 %v322, %v337
    %vm340 = vcmp.gt.s32.totalorder %v258, 0
    %v341 = vsel %vm340, %v339, 0.0
    %v342 = vsel %vm340, %v333, 0.0
    %v343 = vpack.c.bf16 %v341, %v341
    %345 = vrot.lane.b32.xlu0 %v343, 32
    %v346 = vpop.permute.xlu0 %345
    %v348 = vsel %vm101, %v346, 0
    %350 = vmatprep.subr.bf16.mxu0 0
    %351 = vmatpush1.bf16.msra.mxu0 0
    %352 = vmatprep.subr.bf16.mxu0 0
    %353 = vmatpush1.bf16.msra.mxu0 0
    %354 = vmatprep.subr.bf16.mxu0 0
    %355 = vmatpush1.bf16.msra.mxu0 0
    %356 = vmatprep.subr.bf16.mxu0 0
    %357 = vmatpush1.bf16.msra.mxu0 0
    %358 = vmatprep.subr.bf16.mxu0 0
    %359 = vmatpush1.bf16.msra.mxu0 0
    %360 = vmatprep.subr.bf16.mxu0 0
    %361 = vmatpush1.bf16.msra.mxu0 0
    %362 = vmatprep.subr.bf16.mxu0 0
    %363 = vmatpush1.bf16.msra.mxu0 %v272
    %364 = vmatprep.subr.bf16.mxu0 0
    %365 = vmatpush1.bf16.msra.mxu0 %v271
    %366 = vmatprep.subr.bf16.mxu0 0
    %367 = vmatpush2.bf16.msra.mxu0 0
    %368 = vmatprep.subr.bf16.mxu0 0
    %369 = vmatpush2.bf16.msra.mxu0 0
    %370 = vmatprep.subr.bf16.mxu0 0
    %371 = vmatpush2.bf16.msra.mxu0 0
    %372 = vmatprep.subr.bf16.mxu0 0
    %373 = vmatpush2.bf16.msra.mxu0 0
    %374 = vmatprep.subr.bf16.mxu0 0
    %375 = vmatpush2.bf16.msra.mxu0 0
    %376 = vmatprep.subr.bf16.mxu0 0
    %377 = vmatpush2.bf16.msra.mxu0 0
    %378 = vmatprep.subr.bf16.mxu0 0
    %379 = vmatpush2.bf16.msra.mxu0 0
    %380 = vmatprep.subr.bf16.mxu0 0
    %381 = vmatpush2.bf16.msra.mxu0 0
    %382 = vmatprep.mubr.bf16.mxu0 0
    %383 = vmatmul.mubr.bf16.gmra.mxu0 %v348
    %v384 = vpop.f32.mrf.mxu0
    %v385 = vadd.f32 0.0, %v384
    %v386 = vpop.f32.mrf.mxu0
    %v387 = vpop.f32.mrf.mxu0
    %v388 = vpop.f32.mrf.mxu0
    %389 = vdwg.mxu0
    %v390 = vadd.f32 %v152, %v385
    %v391 = vmul.f32 %v390, %v253
    %v392 = vtanh.pop %v391
    %v393 = vmul.f32 %v253, %v392
    %v394 = vadd.f32 %v393, %v254
    %v395 = vmul.f32 %v394, %v342
    %397 = vrot.lane.b32.xlu0 %v394, 64
    %v398 = vpop.permute.xlu0 %397
    %v400 = vmul.f32 %v394, %v398
    %402 = vrot.lane.b32.xlu0 %v400, 32
    %v403 = vpop.permute.xlu0 %402
    %v405 = vadd.f32 %v395, %v403
    %v406 = vtanh.pop %v405
    %408 = vrot.lane.b32.xlu0 %v406, 64
    %v409 = vpop.permute.xlu0 %408
    %v411 = vmul.f32 %v394, %v409
    %vm412 = vcmp.gt.s32.totalorder %v258, 1
    %v413 = vsel %vm412, %v411, %v341
    %v414 = vsel %vm412, %v405, %v342
    %v415 = vpack.c.bf16 %v413, %v413
    %417 = vrot.lane.b32.xlu0 %v415, 32
    %v418 = vpop.permute.xlu0 %417
    %v420 = vsel %vm101, %v418, 0
    %422 = vmatprep.subr.bf16.mxu0 0
    %423 = vmatpush1.bf16.msra.mxu0 0
    %424 = vmatprep.subr.bf16.mxu0 0
    %425 = vmatpush1.bf16.msra.mxu0 0
    %426 = vmatprep.subr.bf16.mxu0 0
    %427 = vmatpush1.bf16.msra.mxu0 0
    %428 = vmatprep.subr.bf16.mxu0 0
    %429 = vmatpush1.bf16.msra.mxu0 0
    %430 = vmatprep.subr.bf16.mxu0 0
    %431 = vmatpush1.bf16.msra.mxu0 0
    %432 = vmatprep.subr.bf16.mxu0 0
    %433 = vmatpush1.bf16.msra.mxu0 0
    %434 = vmatprep.subr.bf16.mxu0 0
    %435 = vmatpush1.bf16.msra.mxu0 %v272
    %436 = vmatprep.subr.bf16.mxu0 0
    %437 = vmatpush1.bf16.msra.mxu0 %v271
    %438 = vmatprep.subr.bf16.mxu0 0
    %439 = vmatpush2.bf16.msra.mxu0 0
    %440 = vmatprep.subr.bf16.mxu0 0
    %441 = vmatpush2.bf16.msra.mxu0 0
    %442 = vmatprep.subr.bf16.mxu0 0
    %443 = vmatpush2.bf16.msra.mxu0 0
    %444 = vmatprep.subr.bf16.mxu0 0
    %445 = vmatpush2.bf16.msra.mxu0 0
    %446 = vmatprep.subr.bf16.mxu0 0
    %447 = vmatpush2.bf16.msra.mxu0 0
    %448 = vmatprep.subr.bf16.mxu0 0
    %449 = vmatpush2.bf16.msra.mxu0 0
    %450 = vmatprep.subr.bf16.mxu0 0
    %451 = vmatpush2.bf16.msra.mxu0 0
    %452 = vmatprep.subr.bf16.mxu0 0
    %453 = vmatpush2.bf16.msra.mxu0 0
    %454 = vmatprep.mubr.bf16.mxu0 0
    %455 = vmatmul.mubr.bf16.gmra.mxu0 %v420
    %v456 = vpop.f32.mrf.mxu0
    %v457 = vadd.f32 0.0, %v456
    %v458 = vpop.f32.mrf.mxu0
    %v459 = vpop.f32.mrf.mxu0
    %v460 = vpop.f32.mrf.mxu0
    %461 = vdwg.mxu0
    %v462 = vadd.f32 %v157, %v457
    %v463 = vmul.f32 %v462, %v253
    %v464 = vtanh.pop %v463
    %v465 = vmul.f32 %v253, %v464
    %v466 = vadd.f32 %v465, %v254
    %v467 = vmul.f32 %v466, %v414
    %469 = vrot.lane.b32.xlu0 %v466, 64
    %v470 = vpop.permute.xlu0 %469
    %v472 = vmul.f32 %v466, %v470
    %474 = vrot.lane.b32.xlu0 %v472, 32
    %v475 = vpop.permute.xlu0 %474
    %v477 = vadd.f32 %v467, %v475
    %v478 = vtanh.pop %v477
    %480 = vrot.lane.b32.xlu0 %v478, 64
    %v481 = vpop.permute.xlu0 %480
    %v483 = vmul.f32 %v466, %v481
    %vm484 = vcmp.gt.s32.totalorder %v258, 2
    %v485 = vsel %vm484, %v483, %v413
    %v486 = vsel %vm484, %v477, %v414
    %v487 = vpack.c.bf16 %v485, %v485
    %489 = vrot.lane.b32.xlu0 %v487, 32
    %v490 = vpop.permute.xlu0 %489
    %v492 = vsel %vm101, %v490, 0
    %494 = vmatprep.subr.bf16.mxu0 0
    %495 = vmatpush1.bf16.msra.mxu0 0
    %496 = vmatprep.subr.bf16.mxu0 0
    %497 = vmatpush1.bf16.msra.mxu0 0
    %498 = vmatprep.subr.bf16.mxu0 0
    %499 = vmatpush1.bf16.msra.mxu0 0
    %500 = vmatprep.subr.bf16.mxu0 0
    %501 = vmatpush1.bf16.msra.mxu0 0
    %502 = vmatprep.subr.bf16.mxu0 0
    %503 = vmatpush1.bf16.msra.mxu0 0
    %504 = vmatprep.subr.bf16.mxu0 0
    %505 = vmatpush1.bf16.msra.mxu0 0
    %506 = vmatprep.subr.bf16.mxu0 0
    %507 = vmatpush1.bf16.msra.mxu0 %v272
    %508 = vmatprep.subr.bf16.mxu0 0
    %509 = vmatpush1.bf16.msra.mxu0 %v271
    %510 = vmatprep.subr.bf16.mxu0 0
    %511 = vmatpush2.bf16.msra.mxu0 0
    %512 = vmatprep.subr.bf16.mxu0 0
    %513 = vmatpush2.bf16.msra.mxu0 0
    %514 = vmatprep.subr.bf16.mxu0 0
    %515 = vmatpush2.bf16.msra.mxu0 0
    %516 = vmatprep.subr.bf16.mxu0 0
    %517 = vmatpush2.bf16.msra.mxu0 0
    %518 = vmatprep.subr.bf16.mxu0 0
    %519 = vmatpush2.bf16.msra.mxu0 0
    %520 = vmatprep.subr.bf16.mxu0 0
    %521 = vmatpush2.bf16.msra.mxu0 0
    %522 = vmatprep.subr.bf16.mxu0 0
    %523 = vmatpush2.bf16.msra.mxu0 0
    %524 = vmatprep.subr.bf16.mxu0 0
    %525 = vmatpush2.bf16.msra.mxu0 0
    %526 = vmatprep.mubr.bf16.mxu0 0
    %527 = vmatmul.mubr.bf16.gmra.mxu0 %v492
    %v528 = vpop.f32.mrf.mxu0
    %v529 = vadd.f32 0.0, %v528
    %v530 = vpop.f32.mrf.mxu0
    %v531 = vpop.f32.mrf.mxu0
    %v532 = vpop.f32.mrf.mxu0
    %533 = vdwg.mxu0
    %v534 = vadd.f32 %v160, %v529
    %v535 = vmul.f32 %v534, %v253
    %v536 = vtanh.pop %v535
    %v537 = vmul.f32 %v253, %v536
    %v538 = vadd.f32 %v537, %v254
    %v539 = vmul.f32 %v538, %v486
    %541 = vrot.lane.b32.xlu0 %v538, 64
    %v542 = vpop.permute.xlu0 %541
    %v544 = vmul.f32 %v538, %v542
    %546 = vrot.lane.b32.xlu0 %v544, 32
    %v547 = vpop.permute.xlu0 %546
    %v549 = vadd.f32 %v539, %v547
    %v550 = vtanh.pop %v549
    %552 = vrot.lane.b32.xlu0 %v550, 64
    %v553 = vpop.permute.xlu0 %552
    %v555 = vmul.f32 %v538, %v553
    %vm556 = vcmp.gt.s32.totalorder %v258, 3
    %v557 = vsel %vm556, %v555, %v485
    %v558 = vsel %vm556, %v549, %v486
    %v559 = vpack.c.bf16 %v557, %v557
    %561 = vrot.lane.b32.xlu0 %v559, 32
    %v562 = vpop.permute.xlu0 %561
    %v564 = vsel %vm101, %v562, 0
    %566 = vmatprep.subr.bf16.mxu0 0
    %567 = vmatpush1.bf16.msra.mxu0 0
    %568 = vmatprep.subr.bf16.mxu0 0
    %569 = vmatpush1.bf16.msra.mxu0 0
    %570 = vmatprep.subr.bf16.mxu0 0
    %571 = vmatpush1.bf16.msra.mxu0 0
    %572 = vmatprep.subr.bf16.mxu0 0
    %573 = vmatpush1.bf16.msra.mxu0 0
    %574 = vmatprep.subr.bf16.mxu0 0
    %575 = vmatpush1.bf16.msra.mxu0 0
    %576 = vmatprep.subr.bf16.mxu0 0
    %577 = vmatpush1.bf16.msra.mxu0 0
    %578 = vmatprep.subr.bf16.mxu0 0
    %579 = vmatpush1.bf16.msra.mxu0 %v272
    %580 = vmatprep.subr.bf16.mxu0 0
    %581 = vmatpush1.bf16.msra.mxu0 %v271
    %582 = vmatprep.subr.bf16.mxu0 0
    %583 = vmatpush2.bf16.msra.mxu0 0
    %584 = vmatprep.subr.bf16.mxu0 0
    %585 = vmatpush2.bf16.msra.mxu0 0
    %586 = vmatprep.subr.bf16.mxu0 0
    %587 = vmatpush2.bf16.msra.mxu0 0
    %588 = vmatprep.subr.bf16.mxu0 0
    %589 = vmatpush2.bf16.msra.mxu0 0
    %590 = vmatprep.subr.bf16.mxu0 0
    %591 = vmatpush2.bf16.msra.mxu0 0
    %592 = vmatprep.subr.bf16.mxu0 0
    %593 = vmatpush2.bf16.msra.mxu0 0
    %594 = vmatprep.subr.bf16.mxu0 0
    %595 = vmatpush2.bf16.msra.mxu0 0
    %596 = vmatprep.subr.bf16.mxu0 0
    %597 = vmatpush2.bf16.msra.mxu0 0
    %598 = vmatprep.mubr.bf16.mxu0 0
    %599 = vmatmul.mubr.bf16.gmra.mxu0 %v564
    %v600 = vpop.f32.mrf.mxu0
    %v601 = vadd.f32 0.0, %v600
    %v602 = vpop.f32.mrf.mxu0
    %v603 = vpop.f32.mrf.mxu0
    %v604 = vpop.f32.mrf.mxu0
    %605 = vdwg.mxu0
    %v606 = vadd.f32 %v165, %v601
    %v607 = vmul.f32 %v606, %v253
    %v608 = vtanh.pop %v607
    %v609 = vmul.f32 %v253, %v608
    %v610 = vadd.f32 %v609, %v254
    %v611 = vmul.f32 %v610, %v558
    %613 = vrot.lane.b32.xlu0 %v610, 64
    %v614 = vpop.permute.xlu0 %613
    %v616 = vmul.f32 %v610, %v614
    %618 = vrot.lane.b32.xlu0 %v616, 32
    %v619 = vpop.permute.xlu0 %618
    %v621 = vadd.f32 %v611, %v619
    %v622 = vtanh.pop %v621
    %624 = vrot.lane.b32.xlu0 %v622, 64
    %v625 = vpop.permute.xlu0 %624
    %v627 = vmul.f32 %v610, %v625
    %vm628 = vcmp.gt.s32.totalorder %v258, 4
    %v629 = vsel %vm628, %v627, %v557
    %v630 = vsel %vm628, %v621, %v558
    %v631 = vpack.c.bf16 %v629, %v629
    %633 = vrot.lane.b32.xlu0 %v631, 32
    %v634 = vpop.permute.xlu0 %633
    %v636 = vsel %vm101, %v634, 0
    %638 = vmatprep.subr.bf16.mxu0 0
    %639 = vmatpush1.bf16.msra.mxu0 0
    %640 = vmatprep.subr.bf16.mxu0 0
    %641 = vmatpush1.bf16.msra.mxu0 0
    %642 = vmatprep.subr.bf16.mxu0 0
    %643 = vmatpush1.bf16.msra.mxu0 0
    %644 = vmatprep.subr.bf16.mxu0 0
    %645 = vmatpush1.bf16.msra.mxu0 0
    %646 = vmatprep.subr.bf16.mxu0 0
    %647 = vmatpush1.bf16.msra.mxu0 0
    %648 = vmatprep.subr.bf16.mxu0 0
    %649 = vmatpush1.bf16.msra.mxu0 0
    %650 = vmatprep.subr.bf16.mxu0 0
    %651 = vmatpush1.bf16.msra.mxu0 %v272
    %652 = vmatprep.subr.bf16.mxu0 0
    %653 = vmatpush1.bf16.msra.mxu0 %v271
    %654 = vmatprep.subr.bf16.mxu0 0
    %655 = vmatpush2.bf16.msra.mxu0 0
    %656 = vmatprep.subr.bf16.mxu0 0
    %657 = vmatpush2.bf16.msra.mxu0 0
    %658 = vmatprep.subr.bf16.mxu0 0
    %659 = vmatpush2.bf16.msra.mxu0 0
    %660 = vmatprep.subr.bf16.mxu0 0
    %661 = vmatpush2.bf16.msra.mxu0 0
    %662 = vmatprep.subr.bf16.mxu0 0
    %663 = vmatpush2.bf16.msra.mxu0 0
    %664 = vmatprep.subr.bf16.mxu0 0
    %665 = vmatpush2.bf16.msra.mxu0 0
    %666 = vmatprep.subr.bf16.mxu0 0
    %667 = vmatpush2.bf16.msra.mxu0 0
    %668 = vmatprep.subr.bf16.mxu0 0
    %669 = vmatpush2.bf16.msra.mxu0 0
    %670 = vmatprep.mubr.bf16.mxu0 0
    %671 = vmatmul.mubr.bf16.gmra.mxu0 %v636
    %v672 = vpop.f32.mrf.mxu0
    %v673 = vadd.f32 0.0, %v672
    %v674 = vpop.f32.mrf.mxu0
    %v675 = vpop.f32.mrf.mxu0
    %v676 = vpop.f32.mrf.mxu0
    %677 = vdwg.mxu0
    %v678 = vadd.f32 %v168, %v673
    %v679 = vmul.f32 %v678, %v253
    %v680 = vtanh.pop %v679
    %v681 = vmul.f32 %v253, %v680
    %v682 = vadd.f32 %v681, %v254
    %v683 = vmul.f32 %v682, %v630
    %685 = vrot.lane.b32.xlu0 %v682, 64
    %v686 = vpop.permute.xlu0 %685
    %v688 = vmul.f32 %v682, %v686
    %690 = vrot.lane.b32.xlu0 %v688, 32
    %v691 = vpop.permute.xlu0 %690
    %v693 = vadd.f32 %v683, %v691
    %v694 = vtanh.pop %v693
    %696 = vrot.lane.b32.xlu0 %v694, 64
    %v697 = vpop.permute.xlu0 %696
    %v699 = vmul.f32 %v682, %v697
    %vm700 = vcmp.gt.s32.totalorder %v258, 5
    %v701 = vsel %vm700, %v699, %v629
    %v702 = vsel %vm700, %v693, %v630
    %v703 = vpack.c.bf16 %v701, %v701
    %705 = vrot.lane.b32.xlu0 %v703, 32
    %v706 = vpop.permute.xlu0 %705
    %v708 = vsel %vm101, %v706, 0
    %710 = vmatprep.subr.bf16.mxu0 0
    %711 = vmatpush1.bf16.msra.mxu0 0
    %712 = vmatprep.subr.bf16.mxu0 0
    %713 = vmatpush1.bf16.msra.mxu0 0
    %714 = vmatprep.subr.bf16.mxu0 0
    %715 = vmatpush1.bf16.msra.mxu0 0
    %716 = vmatprep.subr.bf16.mxu0 0
    %717 = vmatpush1.bf16.msra.mxu0 0
    %718 = vmatprep.subr.bf16.mxu0 0
    %719 = vmatpush1.bf16.msra.mxu0 0
    %720 = vmatprep.subr.bf16.mxu0 0
    %721 = vmatpush1.bf16.msra.mxu0 0
    %722 = vmatprep.subr.bf16.mxu0 0
    %723 = vmatpush1.bf16.msra.mxu0 %v272
    %724 = vmatprep.subr.bf16.mxu0 0
    %725 = vmatpush1.bf16.msra.mxu0 %v271
    %726 = vmatprep.subr.bf16.mxu0 0
    %727 = vmatpush2.bf16.msra.mxu0 0
    %728 = vmatprep.subr.bf16.mxu0 0
    %729 = vmatpush2.bf16.msra.mxu0 0
    %730 = vmatprep.subr.bf16.mxu0 0
    %731 = vmatpush2.bf16.msra.mxu0 0
    %732 = vmatprep.subr.bf16.mxu0 0
    %733 = vmatpush2.bf16.msra.mxu0 0
    %734 = vmatprep.subr.bf16.mxu0 0
    %735 = vmatpush2.bf16.msra.mxu0 0
    %736 = vmatprep.subr.bf16.mxu0 0
    %737 = vmatpush2.bf16.msra.mxu0 0
    %738 = vmatprep.subr.bf16.mxu0 0
    %739 = vmatpush2.bf16.msra.mxu0 0
    %740 = vmatprep.subr.bf16.mxu0 0
    %741 = vmatpush2.bf16.msra.mxu0 0
    %742 = vmatprep.mubr.bf16.mxu0 0
    %743 = vmatmul.mubr.bf16.gmra.mxu0 %v708
    %v744 = vpop.f32.mrf.mxu0
    %v745 = vadd.f32 0.0, %v744
    %v746 = vpop.f32.mrf.mxu0
    %v747 = vpop.f32.mrf.mxu0
    %v748 = vpop.f32.mrf.mxu0
    %749 = vdwg.mxu0
    %v750 = vadd.f32 %v173, %v745
    %v751 = vmul.f32 %v750, %v253
    %v752 = vtanh.pop %v751
    %v753 = vmul.f32 %v253, %v752
    %v754 = vadd.f32 %v753, %v254
    %v755 = vmul.f32 %v754, %v702
    %757 = vrot.lane.b32.xlu0 %v754, 64
    %v758 = vpop.permute.xlu0 %757
    %v760 = vmul.f32 %v754, %v758
    %762 = vrot.lane.b32.xlu0 %v760, 32
    %v763 = vpop.permute.xlu0 %762
    %v765 = vadd.f32 %v755, %v763
    %v766 = vtanh.pop %v765
    %768 = vrot.lane.b32.xlu0 %v766, 64
    %v769 = vpop.permute.xlu0 %768
    %v771 = vmul.f32 %v754, %v769
    %vm772 = vcmp.gt.s32.totalorder %v258, 6
    %v773 = vsel %vm772, %v771, %v701
    %v774 = vsel %vm772, %v765, %v702
    %v775 = vpack.c.bf16 %v773, %v773
    %777 = vrot.lane.b32.xlu0 %v775, 32
    %v778 = vpop.permute.xlu0 %777
    %v780 = vsel %vm101, %v778, 0
    %782 = vmatprep.subr.bf16.mxu0 0
    %783 = vmatpush1.bf16.msra.mxu0 0
    %784 = vmatprep.subr.bf16.mxu0 0
    %785 = vmatpush1.bf16.msra.mxu0 0
    %786 = vmatprep.subr.bf16.mxu0 0
    %787 = vmatpush1.bf16.msra.mxu0 0
    %788 = vmatprep.subr.bf16.mxu0 0
    %789 = vmatpush1.bf16.msra.mxu0 0
    %790 = vmatprep.subr.bf16.mxu0 0
    %791 = vmatpush1.bf16.msra.mxu0 0
    %792 = vmatprep.subr.bf16.mxu0 0
    %793 = vmatpush1.bf16.msra.mxu0 0
    %794 = vmatprep.subr.bf16.mxu0 0
    %795 = vmatpush1.bf16.msra.mxu0 %v272
    %796 = vmatprep.subr.bf16.mxu0 0
    %797 = vmatpush1.bf16.msra.mxu0 %v271
    %798 = vmatprep.subr.bf16.mxu0 0
    %799 = vmatpush2.bf16.msra.mxu0 0
    %800 = vmatprep.subr.bf16.mxu0 0
    %801 = vmatpush2.bf16.msra.mxu0 0
    %802 = vmatprep.subr.bf16.mxu0 0
    %803 = vmatpush2.bf16.msra.mxu0 0
    %804 = vmatprep.subr.bf16.mxu0 0
    %805 = vmatpush2.bf16.msra.mxu0 0
    %806 = vmatprep.subr.bf16.mxu0 0
    %807 = vmatpush2.bf16.msra.mxu0 0
    %808 = vmatprep.subr.bf16.mxu0 0
    %809 = vmatpush2.bf16.msra.mxu0 0
    %810 = vmatprep.subr.bf16.mxu0 0
    %811 = vmatpush2.bf16.msra.mxu0 0
    %812 = vmatprep.subr.bf16.mxu0 0
    %813 = vmatpush2.bf16.msra.mxu0 0
    %814 = vmatprep.mubr.bf16.mxu0 0
    %815 = vmatmul.mubr.bf16.gmra.mxu0 %v780
    %v816 = vpop.f32.mrf.mxu0
    %v817 = vadd.f32 0.0, %v816
    %v818 = vpop.f32.mrf.mxu0
    %v819 = vpop.f32.mrf.mxu0
    %v820 = vpop.f32.mrf.mxu0
    %821 = vdwg.mxu0
    %v822 = vadd.f32 %v176, %v817
    %v823 = vmul.f32 %v822, %v253
    %v824 = vtanh.pop %v823
    %v825 = vmul.f32 %v253, %v824
    %v826 = vadd.f32 %v825, %v254
    %v827 = vmul.f32 %v826, %v774
    %829 = vrot.lane.b32.xlu0 %v826, 64
    %v830 = vpop.permute.xlu0 %829
    %v832 = vmul.f32 %v826, %v830
    %834 = vrot.lane.b32.xlu0 %v832, 32
    %v835 = vpop.permute.xlu0 %834
    %v837 = vadd.f32 %v827, %v835
    %v838 = vtanh.pop %v837
    %840 = vrot.lane.b32.xlu0 %v838, 64
    %v841 = vpop.permute.xlu0 %840
    %v843 = vmul.f32 %v826, %v841
    %vm844 = vcmp.gt.s32.totalorder %v258, 7
    %v845 = vsel %vm844, %v843, %v773
    %v846 = vpack.c.bf16 %v845, %v845
    %v847 = vld [vmem:[%s6] sm:$0xf]
    %v848 = vld [vmem:[%s6 + $0x4] sm:$0xf]
    %v849 = vld [vmem:[%s6 + $0x8] sm:$0xf]
    %v850 = vld [vmem:[%s6 + $0xc] sm:$0xf]
    %852 = vrot.lane.b32.xlu0 %v846, 32
    %v853 = vpop.permute.xlu0 %852
    %v858 = vunpack.c.l.b16 %v847
    %v859 = vunpack.c.l.b16 %v848
    %v860 = vunpack.c.l.b16 %v849
    %v861 = vunpack.c.l.b16 %v850
    %v862 = vpack.c.b16 %v859, %v858
    %v863 = vpack.c.b16 %v861, %v860
    %v867 = vsel %vm101, %v853, 0
    %869 = vmatprep.subr.bf16.mxu0 0
    %870 = vmatpush1.bf16.msra.mxu0 0
    %871 = vmatprep.subr.bf16.mxu0 0
    %872 = vmatpush1.bf16.msra.mxu0 0
    %873 = vmatprep.subr.bf16.mxu0 0
    %874 = vmatpush1.bf16.msra.mxu0 0
    %875 = vmatprep.subr.bf16.mxu0 0
    %876 = vmatpush1.bf16.msra.mxu0 0
    %877 = vmatprep.subr.bf16.mxu0 0
    %878 = vmatpush1.bf16.msra.mxu0 0
    %879 = vmatprep.subr.bf16.mxu0 0
    %880 = vmatpush1.bf16.msra.mxu0 0
    %881 = vmatprep.subr.bf16.mxu0 0
    %882 = vmatpush1.bf16.msra.mxu0 %v863
    %883 = vmatprep.subr.bf16.mxu0 0
    %884 = vmatpush1.bf16.msra.mxu0 %v862
    %885 = vmatprep.subr.bf16.mxu0 0
    %886 = vmatpush2.bf16.msra.mxu0 0
    %887 = vmatprep.subr.bf16.mxu0 0
    %888 = vmatpush2.bf16.msra.mxu0 0
    %889 = vmatprep.subr.bf16.mxu0 0
    %890 = vmatpush2.bf16.msra.mxu0 0
    %891 = vmatprep.subr.bf16.mxu0 0
    %892 = vmatpush2.bf16.msra.mxu0 0
    %893 = vmatprep.subr.bf16.mxu0 0
    %894 = vmatpush2.bf16.msra.mxu0 0
    %895 = vmatprep.subr.bf16.mxu0 0
    %896 = vmatpush2.bf16.msra.mxu0 0
    %897 = vmatprep.subr.bf16.mxu0 0
    %898 = vmatpush2.bf16.msra.mxu0 0
    %899 = vmatprep.subr.bf16.mxu0 0
    %900 = vmatpush2.bf16.msra.mxu0 0
    %901 = vmatprep.mubr.bf16.mxu0 0
    %902 = vmatmul.mubr.bf16.gmra.mxu0 %v867
    %v903 = vpop.f32.mrf.mxu0
    %v904 = vadd.f32 %v243, %v903
    %v905 = vpop.f32.mrf.mxu0
    %v906 = vpop.f32.mrf.mxu0
    %v907 = vpop.f32.mrf.mxu0
    %908 = vdwg.mxu0
    %v909 = vmax.f32 %v904, 0.0
    %v910 = vpack.c.bf16 %v909, %v909
    %v911 = vld [vmem:[%s9] sm:$0xf]
    %v912 = vld [vmem:[%s9 + $0x4] sm:$0xf]
    %v913 = vld [vmem:[%s9 + $0x8] sm:$0xf]
    %v914 = vld [vmem:[%s9 + $0xc] sm:$0xf]
    %v915 = vld [vmem:[%s9 + $0x10] sm:$0xf]
    %v916 = vld [vmem:[%s9 + $0x14] sm:$0xf]
    %v917 = vld [vmem:[%s9 + $0x18] sm:$0xf]
    %v918 = vld [vmem:[%s9 + $0x1c] sm:$0xf]
    %v919 = vld [vmem:[%s9 + $0x20] sm:$0xf]
    %v920 = vld [vmem:[%s9 + $0x24] sm:$0xf]
    %v921 = vld [vmem:[%s9 + $0x28] sm:$0xf]
    %v922 = vld [vmem:[%s9 + $0x2c] sm:$0xf]
    %v923 = vld [vmem:[%s9 + $0x30] sm:$0xf]
    %v924 = vld [vmem:[%s9 + $0x34] sm:$0xf]
    %v925 = vld [vmem:[%s9 + $0x38] sm:$0xf]
    %v926 = vld [vmem:[%s9 + $0x3c] sm:$0xf]
    %v927 = vld [vmem:[%s10] sm:$0x1]
    %v929 = vlaneseq
    %v930 = vshrl.u32 %v929, 7
    %v931 = vsub.s32 0, %v930
    %v932 = vrot.slane %v927, %v931
    %v950 = vunpack.c.l.b16 %v911
    %v951 = vunpack.c.l.b16 %v912
    %v952 = vunpack.c.l.b16 %v913
    %v953 = vunpack.c.l.b16 %v914
    %v954 = vunpack.c.l.b16 %v915
    %v955 = vunpack.c.l.b16 %v916
    %v956 = vunpack.c.l.b16 %v917
    %v957 = vunpack.c.l.b16 %v918
    %v958 = vunpack.c.l.b16 %v919
    %v959 = vunpack.c.l.b16 %v920
    %v960 = vunpack.c.l.b16 %v921
    %v961 = vunpack.c.l.b16 %v922
    %v962 = vunpack.c.l.b16 %v923
    %v963 = vunpack.c.l.b16 %v924
    %v964 = vunpack.c.l.b16 %v925
    %v965 = vunpack.c.l.b16 %v926
    %v966 = vpack.c.b16 %v951, %v950
    %v967 = vpack.c.b16 %v953, %v952
    %v968 = vpack.c.b16 %v955, %v954
    %v969 = vpack.c.b16 %v957, %v956
    %v970 = vpack.c.b16 %v959, %v958
    %v971 = vpack.c.b16 %v961, %v960
    %v972 = vpack.c.b16 %v963, %v962
    %v973 = vpack.c.b16 %v965, %v964
    %982 = vmatprep.subr.bf16.mxu0 0
    %983 = vmatpush1.bf16.msra.mxu0 %v973
    %984 = vmatprep.subr.bf16.mxu0 0
    %985 = vmatpush1.bf16.msra.mxu0 %v972
    %986 = vmatprep.subr.bf16.mxu0 0
    %987 = vmatpush1.bf16.msra.mxu0 %v971
    %988 = vmatprep.subr.bf16.mxu0 0
    %989 = vmatpush1.bf16.msra.mxu0 %v970
    %990 = vmatprep.subr.bf16.mxu0 0
    %991 = vmatpush1.bf16.msra.mxu0 %v969
    %992 = vmatprep.subr.bf16.mxu0 0
    %993 = vmatpush1.bf16.msra.mxu0 %v968
    %994 = vmatprep.subr.bf16.mxu0 0
    %995 = vmatpush1.bf16.msra.mxu0 %v967
    %996 = vmatprep.subr.bf16.mxu0 0
    %997 = vmatpush1.bf16.msra.mxu0 %v966
    %998 = vmatprep.subr.bf16.mxu0 0
    %999 = vmatpush2.bf16.msra.mxu0 0
    %1000 = vmatprep.subr.bf16.mxu0 0
    %1001 = vmatpush2.bf16.msra.mxu0 0
    %1002 = vmatprep.subr.bf16.mxu0 0
    %1003 = vmatpush2.bf16.msra.mxu0 0
    %1004 = vmatprep.subr.bf16.mxu0 0
    %1005 = vmatpush2.bf16.msra.mxu0 0
    %1006 = vmatprep.subr.bf16.mxu0 0
    %1007 = vmatpush2.bf16.msra.mxu0 0
    %1008 = vmatprep.subr.bf16.mxu0 0
    %1009 = vmatpush2.bf16.msra.mxu0 0
    %1010 = vmatprep.subr.bf16.mxu0 0
    %1011 = vmatpush2.bf16.msra.mxu0 0
    %1012 = vmatprep.subr.bf16.mxu0 0
    %1013 = vmatpush2.bf16.msra.mxu0 0
    %1014 = vmatprep.mubr.bf16.mxu0 0
    %1015 = vmatmul.mubr.bf16.gmra.mxu0 %v910
    %v1016 = vpop.f32.mrf.mxu0
    %v1017 = vadd.f32 %v932, %v1016
    %v1018 = vpop.f32.mrf.mxu0
    %v1019 = vpop.f32.mrf.mxu0
    %v1020 = vpop.f32.mrf.mxu0
    %1021 = vdwg.mxu0
    %1022 = vst [vmem:[#allocation7] sm:$0xff] %v1017
    // Predicated region
    $region54: #{tpu_custom_call.1} parent=1 // pred_check
      _
    $region55: #{tpu_custom_call.1} parent=1 // pred_check_branch
      %1024 = sbr.rel (0) target = $region57
    $region56: #{tpu_custom_call.1} parent=1 // pred_region
      %s1026 = ssub.s32 128, 128
      %1027 = vsyncadd [#allocation4], %s1026
      %s1029 = sshll.u32 [#allocation7], 4
      %s1030 = int_to_ptr.vmem [resolvable:$true] %s1029
      %1032 = dma.vmem_to_hbm [thread:$0]  %s1030, 128, %s11, [#allocation4]
    $region57: #{tpu_custom_call.1} parent=1 // pred_fallthru
      _
    // Predicated region
    $region58: #{tpu_custom_call.1} parent=1 // pred_check
      _
    $region59: #{tpu_custom_call.1} parent=1 // pred_check_branch
      %1034 = sbr.rel (0) target = $region61
    $region60: #{tpu_custom_call.1} parent=1 // pred_region
      %1035 = dma.done [#allocation4], 128
    $region61: #{tpu_custom_call.1} parent=1 // pred_fallthru
      _
    %1036 = vsyncpa [#allocation3], 1
    %1037 = vsyncpa [#allocation6], 1
    %1038 = vsyncpa [#allocation4], 1

</llo_original>
